<compile_context>
chip_gen: v5e
topology: v5e:2x2
jax: 0.10.0
libtpu: 0.0.40
codegen_flags: <defaults>
</compile_context>

<pallas_src>
import jax
import jax.numpy as jnp
from jax import lax
from jax.experimental import pallas as pl
from jax.experimental.pallas import tpu as pltpu


def _make_kernel(Bn, Cr, inv_hw):
    """Build the kernel with Bn (batch block), Cr (= C//16), 1/HW baked in."""

    def kernel(x_ref, w_ref, out_ref, sum_acc, max_acc):
        k = pl.program_id(1)

        # ---- init accumulators at the start of each spatial reduction ----
        @pl.when(k == 0)
        def _():
            sum_acc[...] = jnp.zeros_like(sum_acc)
            max_acc[...] = jnp.full_like(max_acc, -jnp.inf)

        # ---- accumulate avg-pool (sum) and max-pool over this HW tile ----
        xb = x_ref[...].astype(jnp.float32)                    # (Bn, C, tk)
        sum_acc[...] = sum_acc[...] + jnp.sum(xb, axis=-1)     # (Bn, C)
        max_acc[...] = jnp.maximum(max_acc[...], jnp.max(xb, axis=-1))

        # ---- finalize: shared MLP on both pooled vectors + sigmoid ----
        @pl.when(k == pl.num_programs(1) - 1)
        def _():
            avg = sum_acc[...] * inv_hw                        # (Bn, C)
            mx = max_acc[...]                                  # (Bn, C)
            pooled = jnp.concatenate([avg, mx], axis=0)        # (2*Bn, C)

            w1 = w_ref[:Cr, :]                                 # (Cr, C)  fc1
            w2t = w_ref[Cr:, :]                                # (Cr, C)  fc2^T

            # fc1: pooled @ w1^T  -> (2*Bn, Cr)
            h = lax.dot_general(pooled, w1, (((1,), (1,)), ((), ())),
                                preferred_element_type=jnp.float32)
            h = jnp.maximum(h, 0.0)                            # ReLU
            # fc2: h @ w2^T -> (2*Bn, C)
            y = jnp.dot(h, w2t, preferred_element_type=jnp.float32)

            z = y[:Bn] + y[Bn:]                                # avg_out + max_out
            out = 1.0 / (1.0 + jnp.exp(-z))                    # sigmoid (tiny tile)
            out_ref[...] = out.astype(out_ref.dtype)

    return kernel


def channel_attention(x, w1, w2):
    """x: (N, C, H, W); w1: (C//16, C); w2: (C, C//16).  Returns (N, C, 1, 1)."""
    N, C, H, W = x.shape
    HW = H * W
    Cr = w1.shape[0]
    assert w2.shape == (C, Cr), (w2.shape, (C, Cr))

    x_flat = x.reshape(N, C, HW)
    w_packed = jnp.concatenate([w1, w2.T], axis=0)             # (2*Cr, C)

    # Batch block: keep the full batch unless it is large and 8-aligned.
    Bn = 8 if (N > 8 and N % 8 == 0) else N

    # Spatial tile: full HW unless the x tile would exceed ~4 MiB; shrink by
    # halving while keeping the tile a multiple of 128 lanes (and a divisor
    # of HW) so the (8,128) block constraint always holds.
    itemsize = jnp.dtype(x.dtype).itemsize
    tk = HW
    while tk % 2 == 0 and (tk // 2) % 128 == 0 and Bn * C * tk * itemsize > (4 << 20):
        tk //= 2

    nb, nk = N // Bn, HW // tk
    kernel = _make_kernel(Bn, Cr, 1.0 / float(HW))

    # Explicit VMEM budget (double-buffered x tile + weights + out + scratch),
    # clamped so it is valid on v7x (64 MiB physical VMEM) as well as v5e/v6e.
    est = (2 * Bn * C * tk * itemsize
           + 2 * 2 * Cr * C * 4
           + 2 * Bn * C * itemsize
           + 2 * Bn * C * 4)
    vmem_limit = int(min(64 << 20, max(16 << 20, 2 * est)))

    grid_spec = pltpu.PrefetchScalarGridSpec(
        num_scalar_prefetch=0,
        grid=(nb, nk),                                         # reduction axis last
        in_specs=[
            pl.BlockSpec((Bn, C, tk), lambda b, k: (b, 0, k)),  # x tile
            pl.BlockSpec((2 * Cr, C), lambda b, k: (0, 0)),     # packed weights
        ],
        out_specs=pl.BlockSpec((Bn, C), lambda b, k: (b, 0)),
        scratch_shapes=[pltpu.VMEM((Bn, C), jnp.float32),       # running sum
                        pltpu.VMEM((Bn, C), jnp.float32)],      # running max
    )

    out = pl.pallas_call(
        kernel,
        out_shape=jax.ShapeDtypeStruct((N, C), x.dtype),
        grid_spec=grid_spec,
        compiler_params=pltpu.CompilerParams(
            dimension_semantics=("parallel", "arbitrary"),
            vmem_limit_bytes=vmem_limit),
    )(x_flat, w_packed)

    return out.reshape(N, C, 1, 1)


# ----------------------- pure-JAX reference for checking ----------------------
def channel_attention_ref(x, w1, w2):
    avg = jnp.mean(x, axis=(2, 3))                             # (N, C)
    mx = jnp.max(x, axis=(2, 3))                               # (N, C)

    def mlp(p):
        h = jnp.maximum(p @ w1.T, 0.0)
        return h @ w2.T

    out = jax.nn.sigmoid(mlp(avg) + mlp(mx))
    N, C = out.shape
    return out.reshape(N, C, 1, 1)


if __name__ == "__main__":
    key = jax.random.PRNGKey(0)
    N, C, H, W = 2, 32, 16, 16                                 # C >= 16 (fc1 is C -> C//16)
    Cr = C // 16
    k0, k1, k2 = jax.random.split(key, 3)

    x = jax.random.normal(k0, (N, C, H, W), jnp.float32)
    w1 = jax.random.normal(k1, (Cr, C), jnp.float32) * (1.0 / C ** 0.5)
    w2 = jax.random.normal(k2, (C, Cr), jnp.float32) * (1.0 / max(Cr, 1) ** 0.5)

    out = channel_attention(x, w1, w2)
    jax.block_until_ready(out)

    ref = channel_attention_ref(x, w1, w2)
    err = float(jnp.max(jnp.abs(out - ref)))
    assert out.shape == (N, C, 1, 1), out.shape
    assert err < 1e-3, err

    print("KERNEL_OK")
</pallas_src>

<mosaic_0001>
module attributes {stable_mosaic.version = 11 : i64} {
  func.func @kernel(%arg0: i32, %arg1: i32, %arg2: memref<2x32x256xf32, #tpu.memory_space<vmem>>, %arg3: memref<4x32xf32, #tpu.memory_space<vmem>>, %arg4: memref<2x32xf32, #tpu.memory_space<vmem>>, %arg5: memref<2x32xf32, #tpu.memory_space<vmem>>, %arg6: memref<2x32xf32, #tpu.memory_space<vmem>>) attributes {dimension_semantics = [#tpu.dimension_semantics<parallel>, #tpu.dimension_semantics<arbitrary>], iteration_bounds = array<i64: 1, 1>, scalar_prefetch = 0 : i64, scratch_operands = 2 : i64, tpu.core_type = #tpu.core_type<tc>, window_params = [{transform_indices = @transform_0, window_bounds = array<i64: 2, 32, 256>}, {pipeline_mode = #tpu.pipeline_mode<synchronous>, transform_indices = @transform_1, window_bounds = array<i64: 4, 32>}, {transform_indices = @transform_2, window_bounds = array<i64: 2, 32>}]} {
    %c0_i32 = arith.constant 0 : i32
    %0 = arith.cmpi eq, %arg1, %c0_i32 : i32
    %1 = arith.extui %0 : i1 to i32
    %c0_i32_0 = arith.constant 0 : i32
    %2 = arith.cmpi ne, %1, %c0_i32_0 : i32
    scf.if %2 {
      %cst_14 = arith.constant 0.000000e+00 : f32
      %15 = vector.broadcast %cst_14 : f32 to vector<2x32xf32>
      %c0_15 = arith.constant 0 : index
      %c0_16 = arith.constant 0 : index
      %16 = vector.load %arg5[%c0_15, %c0_16] : memref<2x32xf32, #tpu.memory_space<vmem>>, vector<2x32xf32>
      tpu.vector_store %arg5[%c0_15, %c0_16], %15 {strides = array<i32>} : memref<2x32xf32, #tpu.memory_space<vmem>>, vector<2x32xf32>,
      %cst_17 = arith.constant 0xFF800000 : f32
      %17 = vector.broadcast %cst_17 : f32 to vector<2x32xf32>
      %c0_18 = arith.constant 0 : index
      %c0_19 = arith.constant 0 : index
      %18 = vector.load %arg6[%c0_18, %c0_19] : memref<2x32xf32, #tpu.memory_space<vmem>>, vector<2x32xf32>
      tpu.vector_store %arg6[%c0_18, %c0_19], %17 {strides = array<i32>} : memref<2x32xf32, #tpu.memory_space<vmem>>, vector<2x32xf32>,
    } else {
    }
    %c0 = arith.constant 0 : index
    %c0_1 = arith.constant 0 : index
    %c0_2 = arith.constant 0 : index
    %3 = vector.load %arg2[%c0, %c0_1, %c0_2] : memref<2x32x256xf32, #tpu.memory_space<vmem>>, vector<2x32x256xf32>
    %c0_3 = arith.constant 0 : index
    %c0_4 = arith.constant 0 : index
    %4 = vector.load %arg5[%c0_3, %c0_4] : memref<2x32xf32, #tpu.memory_space<vmem>>, vector<2x32xf32>
    %cst = arith.constant dense<0.000000e+00> : vector<2x32xf32>
    %5 = vector.multi_reduction <add>, %3, %cst [2] : vector<2x32x256xf32> to vector<2x32xf32>
    %6 = arith.addf %4, %5 : vector<2x32xf32>
    %c0_5 = arith.constant 0 : index
    %c0_6 = arith.constant 0 : index
    %7 = vector.load %arg5[%c0_5, %c0_6] : memref<2x32xf32, #tpu.memory_space<vmem>>, vector<2x32xf32>
    tpu.vector_store %arg5[%c0_5, %c0_6], %6 {strides = array<i32>} : memref<2x32xf32, #tpu.memory_space<vmem>>, vector<2x32xf32>,
    %c0_7 = arith.constant 0 : index
    %c0_8 = arith.constant 0 : index
    %8 = vector.load %arg6[%c0_7, %c0_8] : memref<2x32xf32, #tpu.memory_space<vmem>>, vector<2x32xf32>
    %cst_9 = arith.constant dense<0xFF800000> : vector<2x32xf32>
    %9 = vector.multi_reduction <maximumf>, %3, %cst_9 [2] : vector<2x32x256xf32> to vector<2x32xf32>
    %10 = arith.maximumf %8, %9 : vector<2x32xf32>
    %c0_10 = arith.constant 0 : index
    %c0_11 = arith.constant 0 : index
    %11 = vector.load %arg6[%c0_10, %c0_11] : memref<2x32xf32, #tpu.memory_space<vmem>>, vector<2x32xf32>
    tpu.vector_store %arg6[%c0_10, %c0_11], %10 {strides = array<i32>} : memref<2x32xf32, #tpu.memory_space<vmem>>, vector<2x32xf32>,
    %c0_i32_12 = arith.constant 0 : i32
    %12 = arith.cmpi eq, %arg1, %c0_i32_12 : i32
    %13 = arith.extui %12 : i1 to i32
    %c0_i32_13 = arith.constant 0 : i32
    %14 = arith.cmpi ne, %13, %c0_i32_13 : i32
    scf.if %14 {
      %c0_14 = arith.constant 0 : index
      %c0_15 = arith.constant 0 : index
      %15 = vector.load %arg5[%c0_14, %c0_15] : memref<2x32xf32, #tpu.memory_space<vmem>>, vector<2x32xf32>
      %cst_16 = arith.constant 3.906250e-03 : f32
      %16 = vector.broadcast %cst_16 : f32 to vector<2x32xf32>
      %17 = arith.mulf %15, %16 : vector<2x32xf32>
      %c0_17 = arith.constant 0 : index
      %c0_18 = arith.constant 0 : index
      %18 = vector.load %arg6[%c0_17, %c0_18] : memref<2x32xf32, #tpu.memory_space<vmem>>, vector<2x32xf32>
      %19 = tpu.concatenate %17, %18 in 0 : vector<2x32xf32>, vector<2x32xf32> -> vector<4x32xf32>
      %c0_19 = arith.constant 0 : index
      %c0_20 = arith.constant 0 : index
      %20 = vector.load %arg3[%c0_19, %c0_20] : memref<4x32xf32, #tpu.memory_space<vmem>>, vector<2x32xf32>
      %c2 = arith.constant 2 : index
      %c0_21 = arith.constant 0 : index
      %21 = vector.load %arg3[%c2, %c0_21] : memref<4x32xf32, #tpu.memory_space<vmem>>, vector<2x32xf32>
      %cst_22 = arith.constant dense<0.000000e+00> : vector<4x2xf32>
      %22 = tpu.matmul %19, %20, %cst_22 {dimension_numbers = #tpu.dot_dimension_numbers<[1], [1], [0], [0], [0, 0, 1, 0], [], []>} : vector<4x32xf32>, vector<2x32xf32>, vector<4x2xf32> -> vector<4x2xf32>
      %cst_23 = arith.constant 0.000000e+00 : f32
      %23 = vector.broadcast %cst_23 : f32 to vector<4x2xf32>
      %24 = arith.maximumf %22, %23 : vector<4x2xf32>
      %cst_24 = arith.constant dense<0.000000e+00> : vector<4x32xf32>
      %25 = tpu.matmul %24, %21, %cst_24 {dimension_numbers = #tpu.dot_dimension_numbers<[1], [0], [0], [1], [0, 0, 1, 1], [], []>} : vector<4x2xf32>, vector<2x32xf32>, vector<4x32xf32> -> vector<4x32xf32>
      %26 = vector.extract_strided_slice %25 {offsets = [0, 0], sizes = [2, 32], strides = [1, 1]} : vector<4x32xf32> to vector<2x32xf32>
      %27 = vector.extract_strided_slice %25 {offsets = [2, 0], sizes = [2, 32], strides = [1, 1]} : vector<4x32xf32> to vector<2x32xf32>
      %28 = arith.addf %26, %27 : vector<2x32xf32>
      %cst_25 = arith.constant 0.000000e+00 : f32
      %29 = vector.broadcast %cst_25 : f32 to vector<2x32xf32>
      %30 = arith.subf %29, %28 : vector<2x32xf32>
      %31 = math.exp %30 : vector<2x32xf32>
      %cst_26 = arith.constant 1.000000e+00 : f32
      %32 = vector.broadcast %cst_26 : f32 to vector<2x32xf32>
      %33 = arith.addf %32, %31 : vector<2x32xf32>
      %cst_27 = arith.constant 1.000000e+00 : f32
      %34 = vector.broadcast %cst_27 : f32 to vector<2x32xf32>
      %35 = arith.divf %34, %33 : vector<2x32xf32>
      %c0_28 = arith.constant 0 : index
      %c0_29 = arith.constant 0 : index
      %36 = vector.load %arg4[%c0_28, %c0_29] : memref<2x32xf32, #tpu.memory_space<vmem>>, vector<2x32xf32>
      tpu.vector_store %arg4[%c0_28, %c0_29], %35 {strides = array<i32>} : memref<2x32xf32, #tpu.memory_space<vmem>>, vector<2x32xf32>,
    } else {
    }
    return
  }
  func.func @transform_0(%arg0: i32, %arg1: i32) -> (i32, i32, i32) {
    %c0_i32 = arith.constant 0 : i32
    %c0_i32_0 = arith.constant 0 : i32
    return %arg0, %c0_i32, %arg1 : i32, i32, i32
  }
  func.func @transform_1(%arg0: i32, %arg1: i32) -> (i32, i32) {
    %c0_i32 = arith.constant 0 : i32
    %c0_i32_0 = arith.constant 0 : i32
    %c0_i32_1 = arith.constant 0 : i32
    return %c0_i32, %c0_i32_0 : i32, i32
  }
  func.func @transform_2(%arg0: i32, %arg1: i32) -> (i32, i32) {
    %c0_i32 = arith.constant 0 : i32
    %c0_i32_0 = arith.constant 0 : i32
    return %arg0, %c0_i32 : i32, i32
  }
}

</mosaic_0001>

<llo_original>
// kernel: tpu_custom_call.1
$region0: #{tpu_custom_call.1}
  #allocation0 [shape = 'u32[]', space=smem, size = 0x4, offset = 0x4, fixed_abs, tag = 'smem constant byte address 0x4 - core index']
  #allocation1 [shape = 'u32[72,128]{1,0:T(1,128)}', space=vmem, size = 0x9000, scoped, tag = 'internal scratch']
  #allocation2 [shape = 'f32[2,32]{1,0:T(2,128)}', space=vmem, size = 0x400, scoped, tag = 'scratch operand']
  #allocation3 [shape = 'f32[2,32]{1,0:T(2,128)}', space=vmem, size = 0x400, scoped, tag = 'scratch operand']
  %s0 = inlined_call_operand.hbm [shape: f32[2,32,256], index: 0, kind: input, shape index: {}]
  %s1 = inlined_call_operand.hbm [shape: f32[4,32], index: 1, kind: input, shape index: {}]
  %s2 = inlined_call_operand.hbm [shape: f32[2,32], index: 2, kind: output, shape index: {}]
  %s3 = sld [smem:[#allocation0]]
  $region34: #{tpu_custom_call.1} parent=0
    _
  %s5 = ssub.s32 1, %s3
  %s6 = scalar_select 0, %s5, %s3
  $region1: #{tpu_custom_call.1} parent=0
    #allocation4 [shape = 'u8[65536]{0}', space=vmem, size = 0x10000, scoped, tag = 'input window, operand 0, single buffered']
    #allocation5 [shape = 's32[1]{0}', space=sflag, size = 0x4, scoped, tag = 'scoped memory for tpu_custom_call.1']
    #allocation6 [shape = 's32[1]{0}', space=sflag, size = 0x4, scoped, tag = 'scoped memory for tpu_custom_call.1']
    #allocation7 [shape = 'u8[2048]{0}', space=vmem, size = 0x800, scoped, tag = 'input window, operand 1, single buffered']
    #allocation8 [shape = 's32[1]{0}', space=sflag, size = 0x4, scoped, tag = 'scoped memory for tpu_custom_call.1']
    #allocation9 [shape = 'u8[1024]{0}', space=vmem, size = 0x400, scoped, tag = 'output window, operand 0, single buffered']
    %7 = vsyncpa [#allocation5], 0
    %8 = vsyncpa [#allocation8], 0
    %9 = vsyncpa [#allocation6], 0
    // Predicated region
    $region2: #{tpu_custom_call.1} parent=1 // pred_check
      _
    $region3: #{tpu_custom_call.1} parent=1 // pred_check_branch
      %11 = sbr.rel (0) target = $region5
    $region4: #{tpu_custom_call.1} parent=1 // pred_region
      %13 = vsyncadd [#allocation5], 0
      %s14 = sshll.u32 %s0, 4
      %s15 = int_to_ptr.hbm [resolvable:$true] %s14
      %s16 = sshll.u32 [#allocation4], 4
      %s17 = int_to_ptr.vmem [resolvable:$true] %s16
      %22 = dma.hbm_to_vmem [thread:$0]  %s15, 2048, %s17, [#allocation5], 256, 256, 16
    $region5: #{tpu_custom_call.1} parent=1 // pred_fallthru
      _
    // Predicated region
    $region6: #{tpu_custom_call.1} parent=1 // pred_check
      _
    $region7: #{tpu_custom_call.1} parent=1 // pred_check_branch
      %24 = sbr.rel (0) target = $region9
    $region8: #{tpu_custom_call.1} parent=1 // pred_region
      %26 = vsyncadd [#allocation8], 0
      %s28 = sshll.u32 %s1, 4
      %s29 = int_to_ptr.hbm [resolvable:$true] %s28
      %s30 = sshll.u32 [#allocation7], 4
      %s31 = int_to_ptr.vmem [resolvable:$true] %s30
      %33 = dma.hbm_to_vmem [thread:$0]  %s29, 64, %s31, [#allocation8]
    $region9: #{tpu_custom_call.1} parent=1 // pred_fallthru
      _
    // Predicated region
    $region10: #{tpu_custom_call.1} parent=1 // pred_check
      _
    $region11: #{tpu_custom_call.1} parent=1 // pred_check_branch
      %35 = sbr.rel (0) target = $region13
    $region12: #{tpu_custom_call.1} parent=1 // pred_region
      %37 = dma.done [#allocation5], 2048
    $region13: #{tpu_custom_call.1} parent=1 // pred_fallthru
      _
    // Predicated region
    $region14: #{tpu_custom_call.1} parent=1 // pred_check
      _
    $region15: #{tpu_custom_call.1} parent=1 // pred_check_branch
      %39 = sbr.rel (0) target = $region17
    $region16: #{tpu_custom_call.1} parent=1 // pred_region
      %41 = dma.done [#allocation8], 64
    $region17: #{tpu_custom_call.1} parent=1 // pred_fallthru
      _
    %p42 = scmp.eq.s32.totalorder 0, 0
    // Predicated region
    $region18: #{tpu_custom_call.1} parent=1 // pred_check
      %p43 = pneg %p42
    $region19: #{tpu_custom_call.1} parent=1 // pred_check_branch
      %45 = sbr.rel (%p43) target = $region21
    $region20: #{tpu_custom_call.1} parent=1 // pred_region
      %vm46 = vcmask 254976
      %47 = vst.msk [vmem:[#allocation2] sm:$0x3] %vm46, 0.0
      %48 = vst.msk [vmem:[#allocation3] sm:$0x3] %vm46, -inf
    $region21: #{tpu_custom_call.1} parent=1 // pred_fallthru
      _
    %v49 = vld [vmem:[#allocation4] sm:$0xff]
    %v50 = vld [vmem:[#allocation4 + $0x8] sm:$0xff]
    %v51 = vld [vmem:[#allocation4 + $0x10] sm:$0xff]
    %v52 = vld [vmem:[#allocation4 + $0x18] sm:$0xff]
    %v53 = vld [vmem:[#allocation4 + $0x20] sm:$0xff]
    %v54 = vld [vmem:[#allocation4 + $0x28] sm:$0xff]
    %v55 = vld [vmem:[#allocation4 + $0x30] sm:$0xff]
    %v56 = vld [vmem:[#allocation4 + $0x38] sm:$0xff]
    %v57 = vld [vmem:[#allocation4 + $0x40] sm:$0xff]
    %v58 = vld [vmem:[#allocation4 + $0x48] sm:$0xff]
    %v59 = vld [vmem:[#allocation4 + $0x50] sm:$0xff]
    %v60 = vld [vmem:[#allocation4 + $0x58] sm:$0xff]
    %v61 = vld [vmem:[#allocation4 + $0x60] sm:$0xff]
    %v62 = vld [vmem:[#allocation4 + $0x68] sm:$0xff]
    %v63 = vld [vmem:[#allocation4 + $0x70] sm:$0xff]
    %v64 = vld [vmem:[#allocation4 + $0x78] sm:$0xff]
    %v65 = vld [vmem:[#allocation2] sm:$0x3]
    %v66 = vadd.f32 %v49, %v50
    %67 = vadd.xlane.f32.xlu0 %v66
    %v68 = vpop.xlane.xlu0 %67
    %v69 = vadd.f32 %v51, %v52
    %70 = vadd.xlane.f32.xlu0 %v69
    %v71 = vpop.xlane.xlu0 %70
    %v72 = vadd.f32 %v53, %v54
    %73 = vadd.xlane.f32.xlu0 %v72
    %v74 = vpop.xlane.xlu0 %73
    %v75 = vadd.f32 %v55, %v56
    %76 = vadd.xlane.f32.xlu0 %v75
    %v77 = vpop.xlane.xlu0 %76
    %v78 = vadd.f32 %v57, %v58
    %79 = vadd.xlane.f32.xlu0 %v78
    %v80 = vpop.xlane.xlu0 %79
    %v81 = vadd.f32 %v59, %v60
    %82 = vadd.xlane.f32.xlu0 %v81
    %v83 = vpop.xlane.xlu0 %82
    %v84 = vadd.f32 %v61, %v62
    %85 = vadd.xlane.f32.xlu0 %v84
    %v86 = vpop.xlane.xlu0 %85
    %v87 = vadd.f32 %v63, %v64
    %88 = vadd.xlane.f32.xlu0 %v87
    %v89 = vpop.xlane.xlu0 %88
    %v98 = vlaneseq
    %v99 = vand.u32 %v98, 127
    %v100 = vperm.slane %v68, %v99
    %v101 = vadd.s32 %v99, 4294967288
    %v102 = vperm.slane %v71, %v101
    %vm103 = vcmask 130112
    %v104 = vsel %vm103, %v102, %v100
    %v105 = vadd.s32 %v99, 4294967280
    %v106 = vperm.slane %v74, %v105
    %vm107 = vcmask 195712
    %v108 = vsel %vm107, %v106, %v104
    %v109 = vadd.s32 %v99, 4294967272
    %v110 = vperm.slane %v77, %v109
    %vm111 = vcmask 261312
    %v112 = vsel %vm111, %v110, %v108
    %v113 = vperm.slane %v80, %v99
    %v114 = vperm.slane %v83, %v101
    %v115 = vsel %vm103, %v114, %v113
    %v116 = vperm.slane %v86, %v105
    %v117 = vsel %vm107, %v116, %v115
    %v118 = vperm.slane %v89, %v109
    %v119 = vsel %vm111, %v118, %v117
    %vm120 = vcmask 1041409
    %v121 = vsel %vm120, %v119, %v112
    %v123 = vadd.f32 %v65, %v121
    %vm124 = vcmask 254976
    %125 = vst.msk [vmem:[#allocation2] sm:$0x3] %vm124, %v123
    %v126 = vld [vmem:[#allocation3] sm:$0x3]
    %v127 = vmax.f32 %v49, %v50
    %128 = vmax.xlane.f32.xlu0 %v127
    %v129 = vpop.xlane.xlu0 %128
    %v130 = vmax.f32 %v51, %v52
    %131 = vmax.xlane.f32.xlu0 %v130
    %v132 = vpop.xlane.xlu0 %131
    %v133 = vmax.f32 %v53, %v54
    %134 = vmax.xlane.f32.xlu0 %v133
    %v135 = vpop.xlane.xlu0 %134
    %v136 = vmax.f32 %v55, %v56
    %137 = vmax.xlane.f32.xlu0 %v136
    %v138 = vpop.xlane.xlu0 %137
    %v139 = vmax.f32 %v57, %v58
    %140 = vmax.xlane.f32.xlu0 %v139
    %v141 = vpop.xlane.xlu0 %140
    %v142 = vmax.f32 %v59, %v60
    %143 = vmax.xlane.f32.xlu0 %v142
    %v144 = vpop.xlane.xlu0 %143
    %v145 = vmax.f32 %v61, %v62
    %146 = vmax.xlane.f32.xlu0 %v145
    %v147 = vpop.xlane.xlu0 %146
    %v148 = vmax.f32 %v63, %v64
    %149 = vmax.xlane.f32.xlu0 %v148
    %v150 = vpop.xlane.xlu0 %149
    %v159 = vperm.slane %v129, %v99
    %v160 = vperm.slane %v132, %v101
    %v161 = vsel %vm103, %v160, %v159
    %v162 = vperm.slane %v135, %v105
    %v163 = vsel %vm107, %v162, %v161
    %v164 = vperm.slane %v138, %v109
    %v165 = vsel %vm111, %v164, %v163
    %v166 = vperm.slane %v141, %v99
    %v167 = vperm.slane %v144, %v101
    %v168 = vsel %vm103, %v167, %v166
    %v169 = vperm.slane %v147, %v105
    %v170 = vsel %vm107, %v169, %v168
    %v171 = vperm.slane %v150, %v109
    %v172 = vsel %vm111, %v171, %v170
    %v173 = vsel %vm120, %v172, %v165
    %v175 = vmax.f32 %v126, %v173
    %176 = vst.msk [vmem:[#allocation3] sm:$0x3] %vm124, %v175
    // Predicated region
    $region22: #{tpu_custom_call.1} parent=1 // pred_check
      %p177 = pneg %p42
    $region23: #{tpu_custom_call.1} parent=1 // pred_check_branch
      %179 = sbr.rel (%p177) target = $region25
    $region24: #{tpu_custom_call.1} parent=1 // pred_region
      %v180 = vld [vmem:[#allocation2] sm:$0x3]
      %v181 = vmul.f32 %v180, 0.00390625
      %v182 = vld [vmem:[#allocation3] sm:$0x3]
      %v184 = vrot.slane %v182, 6
      %vm186 = vcmask 1041408
      %v187 = vsel %vm186, %v181, %v184
      %v188 = vld [vmem:[#allocation7] sm:$0x3]
      %v189 = vld [vmem:[#allocation7 + $0x2] sm:$0x3]
      %vm190 = vcmask 261120
      %v192 = vsel %vm190, %v187, 0
      %v195 = vsel %vm190, %v188, 0
      %197 = vmatpush.xpose.msra.mxu0 0.0
      %198 = vmatpush.xpose.msra.mxu0 0.0
      %199 = vmatpush.xpose.msra.mxu0 0.0
      %200 = vmatpush.xpose.msra.mxu0 0.0
      %201 = vmatpush.xpose.msra.mxu0 0.0
      %202 = vmatpush.xpose.msra.mxu0 0.0
      %203 = vmatpush.xpose.msra.mxu0 0.0
      %204 = vmatpush.xpose.msra.mxu0 0.0
      %205 = vmatpush.xpose.msra.mxu0 0.0
      %206 = vmatpush.xpose.msra.mxu0 0.0
      %207 = vmatpush.xpose.msra.mxu0 0.0
      %208 = vmatpush.xpose.msra.mxu0 0.0
      %209 = vmatpush.xpose.msra.mxu0 0.0
      %210 = vmatpush.xpose.msra.mxu0 0.0
      %211 = vmatpush.xpose.msra.mxu0 0.0
      %212 = vmatpush.xpose.msra.mxu0 %v195
      %213 = vmatmul.f32.gmra.mxu0 %v192
      %v214 = vpop.f32.mrf.mxu0
      %v215 = vadd.f32 0.0, %v214
      %216 = vdwg.mxu0
      %v217 = vmax.f32 %v215, 0.0
      %vm218 = vcmask 15360
      %v220 = vsel %vm218, %v217, 0
      %v223 = vsel %vm186, %v189, 0
      %225 = vmatpush.msra.mxu0 0.0
      %226 = vmatpush.msra.mxu0 0.0
      %227 = vmatpush.msra.mxu0 0.0
      %228 = vmatpush.msra.mxu0 0.0
      %229 = vmatpush.msra.mxu0 0.0
      %230 = vmatpush.msra.mxu0 0.0
      %231 = vmatpush.msra.mxu0 0.0
      %232 = vmatpush.msra.mxu0 0.0
      %233 = vmatpush.msra.mxu0 0.0
      %234 = vmatpush.msra.mxu0 0.0
      %235 = vmatpush.msra.mxu0 0.0
      %236 = vmatpush.msra.mxu0 0.0
      %237 = vmatpush.msra.mxu0 0.0
      %238 = vmatpush.msra.mxu0 0.0
      %239 = vmatpush.msra.mxu0 0.0
      %240 = vmatpush.msra.mxu0 %v223
      %241 = vmatmul.f32.gmra.mxu0 %v220
      %v242 = vpop.f32.mrf.mxu0
      %v243 = vadd.f32 0.0, %v242
      %244 = vdwg.mxu0
      %v246 = vrot.slane %v243, 2
      %v248 = vadd.f32 %v243, %v246
      %v249 = vsub.f32 0.0, %v248
      %v250 = vmul.f32 %v249, 1.442695
      %v251 = vpow.pop %v250
      %v252 = vadd.f32 %v251, 1.0
      %v253 = vrcp.pop %v252
      %v254 = vmul.f32 %v252, %v253
      %v255 = vsub.f32 1.0, %v254
      %v256 = vmul.f32 %v253, %v255
      %v257 = vadd.f32 %v253, %v256
      %vm258 = vweird.f32 %v252
      %vm259 = vweird.f32 %v253
      %vm260 = vmor %vm258, %vm259
      %v261 = vsel %vm260, %v253, %v257
      %v262 = vand.u32 2147483647, %v252
      %vm263 = vcmp.eq.f32.partialorder %v262, 8.507059e+37
      %v264 = vand.u32 %v252, 2147483648
      %v265 = vor.u32 1.1754944e-38, %v264
      %v266 = vsel %vm263, %v265, %v261
      %v267 = vmul.f32 1.0, %v266
      %268 = vst.msk [vmem:[#allocation9] sm:$0x3] %vm124, %v267
    $region25: #{tpu_custom_call.1} parent=1 // pred_fallthru
      _
    // Predicated region
    $region26: #{tpu_custom_call.1} parent=1 // pred_check
      _
    $region27: #{tpu_custom_call.1} parent=1 // pred_check_branch
      %270 = sbr.rel (0) target = $region29
    $region28: #{tpu_custom_call.1} parent=1 // pred_region
      %272 = vsyncadd [#allocation6], 0
      %s274 = sshll.u32 [#allocation9], 4
      %s275 = int_to_ptr.vmem [resolvable:$true] %s274
      %s276 = sshll.u32 %s2, 4
      %s277 = int_to_ptr.hbm [resolvable:$true] %s276
      %279 = dma.vmem_to_hbm [thread:$0]  %s275, 32, %s277, [#allocation6]
    $region29: #{tpu_custom_call.1} parent=1 // pred_fallthru
      _
    // Predicated region
    $region30: #{tpu_custom_call.1} parent=1 // pred_check
      _
    $region31: #{tpu_custom_call.1} parent=1 // pred_check_branch
      %281 = sbr.rel (0) target = $region33
    $region32: #{tpu_custom_call.1} parent=1 // pred_region
      %283 = dma.done [#allocation6], 32
    $region33: #{tpu_custom_call.1} parent=1 // pred_fallthru
      _
    %284 = vsyncpa [#allocation5], 1
    %285 = vsyncpa [#allocation8], 1
    %286 = vsyncpa [#allocation6], 1

</llo_original>
